<compile_context>
chip_gen: v7x
topology: tpu7x:2x2x1
jax: 0.10.0
libtpu: 0.0.40
codegen_flags: <defaults>
</compile_context>

<pallas_src>
import functools
import math

import jax
import jax.numpy as jnp
from jax import lax
from jax.experimental import pallas as pl
from jax.experimental.pallas import tpu as pltpu


_INV_SQRT2 = 1.0 / math.sqrt(2.0)
_SQRT_2_OVER_PI = math.sqrt(2.0 / math.pi)
_INV_SQRT_PI = 1.0 / math.sqrt(math.pi)


def _crps_kernel(params_ref, y_ref, out_ref, acc_ref, *,
                 n_rows, n_cols, tile_rows, tile_cols, mask_rows, mask_cols):
    i = pl.program_id(0)          # row-block axis ("parallel")
    j = pl.program_id(1)          # column-block / reduction axis ("arbitrary")

    @pl.when(j == 0)
    def _init():
        acc_ref[...] = jnp.zeros_like(acc_ref)

    mean = params_ref[0].astype(jnp.float32)      # (tile_rows, tile_cols)
    sig = params_ref[1].astype(jnp.float32)
    y = y_ref[...].astype(jnp.float32)

    eps = jnp.abs(y - mean)                       # epsilon_error
    inv_sig = pl.reciprocal(sig, approx=False)    # one reciprocal, not 3 divides
    z = eps * inv_sig
    erf_term = z * lax.erf(z * _INV_SQRT2)
    gauss_term = _SQRT_2_OVER_PI * jnp.exp(-0.5 * z * z) - _INV_SQRT_PI
    crps = sig * (erf_term + gauss_term)          # elementwise CRPS

    # Mask out ragged-edge (out-of-bounds) elements; select drops any garbage.
    if mask_rows or mask_cols:
        valid = None
        if mask_rows:
            rows = i * tile_rows + lax.broadcasted_iota(jnp.int32, crps.shape, 0)
            valid = rows < n_rows
        if mask_cols:
            cols = j * tile_cols + lax.broadcasted_iota(jnp.int32, crps.shape, 1)
            cvalid = cols < n_cols
            valid = cvalid if valid is None else (valid & cvalid)
        crps = jnp.where(valid, crps, 0.0)

    # Steady state: pure VPU elementwise accumulation.
    acc_ref[...] += crps

    # One XLU sublane-reduce per row block, only at the last column step.
    @pl.when(j == pl.num_programs(1) - 1)
    def _finalize():
        out_ref[0] = jnp.sum(acc_ref[...], axis=0, keepdims=True)


def crsp_loss(y_pred, y_true, *, tile_rows=None, tile_cols=None):
    """y_pred: (..., 2) with [mean, std] on the last axis; y_true: (...).

    Returns the scalar CRPS loss (f32), matching the PyTorch CRSP module.
    """
    if y_pred.shape[-1] != 2:
        raise ValueError("y_pred must have a trailing axis of size 2 (mean, std)")
    if y_pred.shape[:-1] != y_true.shape:
        raise ValueError("y_pred[..., 0].shape must equal y_true.shape")
    if y_true.ndim < 1:
        raise ValueError("y_true must have at least one dimension")

    n_cols = y_true.shape[-1]                      # lane axis
    n_rows = int(y_true.size // n_cols)            # everything else (sublanes)
    n_elems = n_rows * n_cols

    # Single transpose pass: (…, 2) -> (2, rows, cols). No astype copies here;
    # the kernel upcasts to f32 in VMEM (bf16 inputs stay bf16 over HBM).
    params = jnp.moveaxis(y_pred, -1, 0).reshape(2, n_rows, n_cols)
    y = y_true.reshape(n_rows, n_cols)

    # Tile selection: lane tile multiple of 128 (or full dim), sublane tile
    # multiple of 8 (or full dim).  Max tile = (512, 512) f32:
    #   inputs 3 planes x 2 buffers x 1 MiB + 1 MiB acc ~= 7 MiB VMEM,
    # comfortably under the 32 MiB scoped default on v5e/v6e/v7x, and large
    # enough to sit near the HBM roofline for this memory-bound kernel.
    if tile_cols is None:
        tile_cols = n_cols if n_cols <= 512 else 512
    if tile_rows is None:
        tile_rows = n_rows if n_rows <= 512 else 512
    if tile_cols != n_cols and tile_cols % 128 != 0:
        raise ValueError("tile_cols must be a multiple of 128 or the full dim")
    if tile_rows != n_rows and tile_rows % 8 != 0:
        raise ValueError("tile_rows must be a multiple of 8 or the full dim")

    grid_rows = pl.cdiv(n_rows, tile_rows)
    grid_cols = pl.cdiv(n_cols, tile_cols)
    grid = (grid_rows, grid_cols)
    mask_rows = (n_rows % tile_rows) != 0
    mask_cols = (n_cols % tile_cols) != 0

    kernel = functools.partial(
        _crps_kernel,
        n_rows=n_rows, n_cols=n_cols,
        tile_rows=tile_rows, tile_cols=tile_cols,
        mask_rows=mask_rows, mask_cols=mask_cols)

    itemsize = jnp.dtype(y_pred.dtype).itemsize
    cost = pl.CostEstimate(
        flops=12 * n_elems,
        transcendentals=3 * n_elems,               # erf + exp + reciprocal
        bytes_accessed=3 * n_elems * itemsize + grid_rows * tile_cols * 4,
    )

    # Per-row-block partial sums (lane-dense last dim); tiny final reduce in
    # the wrapper.  Row axis is "parallel" so v7x megacore can split the HBM
    # streaming across TensorCores; column axis carries the VMEM accumulator.
    partials = pl.pallas_call(
        kernel,
        out_shape=jax.ShapeDtypeStruct((grid_rows, 1, tile_cols), jnp.float32),
        grid=grid,
        in_specs=[
            pl.BlockSpec((2, tile_rows, tile_cols), lambda i, j: (0, i, j)),
            pl.BlockSpec((tile_rows, tile_cols), lambda i, j: (i, j)),
        ],
        out_specs=pl.BlockSpec((1, 1, tile_cols), lambda i, j: (i, 0, 0)),
        scratch_shapes=[pltpu.VMEM((tile_rows, tile_cols), jnp.float32)],
        compiler_params=pltpu.CompilerParams(
            dimension_semantics=("parallel", "arbitrary")),
        cost_estimate=cost,
    )(params, y)

    return jnp.sum(partials) / jnp.float32(n_elems)


def _crsp_ref(y_pred, y_true):
    """Pure-JAX reference mirroring the PyTorch module exactly."""
    mean = y_pred[..., 0:1]
    sig = y_pred[..., 1:2]
    y = y_true[..., None]
    eps = jnp.abs(y - mean)
    crps = sig * (
        (eps / sig) * lax.erf(eps / (jnp.sqrt(2.0) * sig))
        + (jnp.sqrt(2.0 / jnp.pi) * jnp.exp((-1.0 * eps**2) / (2.0 * sig**2))
           - 1.0 / jnp.sqrt(jnp.pi))
    )
    return jnp.mean(crps)


if __name__ == "__main__":
    key = jax.random.PRNGKey(0)
    k1, k2, k3 = jax.random.split(key, 3)

    # Small shape consistent with the module: (batch, seq, 2) predictions.
    B, S = 4, 16
    mean = jax.random.normal(k1, (B, S), dtype=jnp.float32)
    std = jnp.abs(jax.random.normal(k2, (B, S), dtype=jnp.float32)) + 0.1
    y_pred = jnp.stack([mean, std], axis=-1)          # (B, S, 2)
    y_true = jax.random.normal(k3, (B, S), dtype=jnp.float32)

    out = jax.block_until_ready(crsp_loss(y_pred, y_true))
    ref = jax.block_until_ready(_crsp_ref(y_pred, y_true))
    assert jnp.allclose(out, ref, rtol=1e-5, atol=1e-6), (out, ref)

    # Second check: force small tiles to exercise the multi-step grid,
    # per-row-block partials, accumulator and ragged-edge masking paths.
    k4, k5, k6 = jax.random.split(jax.random.PRNGKey(1), 3)
    B2, S2 = 12, 200
    mean2 = jax.random.normal(k4, (B2, S2), dtype=jnp.float32)
    std2 = jnp.abs(jax.random.normal(k5, (B2, S2), dtype=jnp.float32)) + 0.1
    y_pred2 = jnp.stack([mean2, std2], axis=-1)
    y_true2 = jax.random.normal(k6, (B2, S2), dtype=jnp.float32)

    out2 = jax.block_until_ready(
        crsp_loss(y_pred2, y_true2, tile_rows=8, tile_cols=128))
    ref2 = jax.block_until_ready(_crsp_ref(y_pred2, y_true2))
    assert jnp.allclose(out2, ref2, rtol=1e-5, atol=1e-6), (out2, ref2)

    print("KERNEL_OK")
</pallas_src>

<mosaic_0001>
module attributes {stable_mosaic.version = 11 : i64} {
  func.func @_crps_kernel(%arg0: i32, %arg1: i32, %arg2: memref<2x4x16xf32, #tpu.memory_space<vmem>>, %arg3: memref<4x16xf32, #tpu.memory_space<vmem>>, %arg4: memref<1x1x16xf32, #tpu.memory_space<vmem>>, %arg5: memref<4x16xf32, #tpu.memory_space<vmem>>) attributes {dimension_semantics = [#tpu.dimension_semantics<parallel>, #tpu.dimension_semantics<arbitrary>], iteration_bounds = array<i64: 1, 1>, scalar_prefetch = 0 : i64, scratch_operands = 1 : i64, tpu.core_type = #tpu.core_type<tc>, window_params = [{transform_indices = @transform_0, window_bounds = array<i64: 2, 4, 16>}, {transform_indices = @transform_1, window_bounds = array<i64: 4, 16>}, {transform_indices = @transform_2, window_bounds = array<i64: 1, 1, 16>}]} {
    %c0_i32 = arith.constant 0 : i32
    %0 = arith.cmpi eq, %arg1, %c0_i32 : i32
    %1 = arith.extui %0 : i1 to i32
    %c0_i32_0 = arith.constant 0 : i32
    %2 = arith.cmpi ne, %1, %c0_i32_0 : i32
    scf.if %2 {
      %cst_16 = arith.constant 0.000000e+00 : f32
      %32 = vector.broadcast %cst_16 : f32 to vector<4x16xf32>
      %c0_17 = arith.constant 0 : index
      %c0_18 = arith.constant 0 : index
      %33 = vector.load %arg5[%c0_17, %c0_18] : memref<4x16xf32, #tpu.memory_space<vmem>>, vector<4x16xf32>
      tpu.vector_store %arg5[%c0_17, %c0_18], %32 {strides = array<i32>} : memref<4x16xf32, #tpu.memory_space<vmem>>, vector<4x16xf32>,
    } else {
    }
    %c0 = arith.constant 0 : index
    %c0_1 = arith.constant 0 : index
    %c0_2 = arith.constant 0 : index
    %3 = vector.load %arg2[%c0, %c0_1, %c0_2] : memref<2x4x16xf32, #tpu.memory_space<vmem>>, vector<1x4x16xf32>
    %4 = vector.shape_cast %3 : vector<1x4x16xf32> to vector<4x16xf32>
    %c1 = arith.constant 1 : index
    %c0_3 = arith.constant 0 : index
    %c0_4 = arith.constant 0 : index
    %5 = vector.load %arg2[%c1, %c0_3, %c0_4] : memref<2x4x16xf32, #tpu.memory_space<vmem>>, vector<1x4x16xf32>
    %6 = vector.shape_cast %5 : vector<1x4x16xf32> to vector<4x16xf32>
    %c0_5 = arith.constant 0 : index
    %c0_6 = arith.constant 0 : index
    %7 = vector.load %arg3[%c0_5, %c0_6] : memref<4x16xf32, #tpu.memory_space<vmem>>, vector<4x16xf32>
    %8 = arith.subf %7, %4 : vector<4x16xf32>
    %9 = math.absf %8 : vector<4x16xf32>
    %10 = tpu.reciprocal %6 : vector<4x16xf32> -> vector<4x16xf32>
    %11 = arith.mulf %9, %10 : vector<4x16xf32>
    %cst = arith.constant 0.707106769 : f32
    %12 = vector.broadcast %cst : f32 to vector<4x16xf32>
    %13 = arith.mulf %11, %12 : vector<4x16xf32>
    %14 = math.erf %13 : vector<4x16xf32>
    %15 = arith.mulf %11, %14 : vector<4x16xf32>
    %cst_7 = arith.constant -5.000000e-01 : f32
    %16 = vector.broadcast %cst_7 : f32 to vector<4x16xf32>
    %17 = arith.mulf %16, %11 : vector<4x16xf32>
    %18 = arith.mulf %17, %11 : vector<4x16xf32>
    %19 = math.exp %18 : vector<4x16xf32>
    %cst_8 = arith.constant 0.797884583 : f32
    %20 = vector.broadcast %cst_8 : f32 to vector<4x16xf32>
    %21 = arith.mulf %20, %19 : vector<4x16xf32>
    %cst_9 = arith.constant 0.564189613 : f32
    %22 = vector.broadcast %cst_9 : f32 to vector<4x16xf32>
    %23 = arith.subf %21, %22 : vector<4x16xf32>
    %24 = arith.addf %15, %23 : vector<4x16xf32>
    %25 = arith.mulf %6, %24 : vector<4x16xf32>
    %c0_10 = arith.constant 0 : index
    %c0_11 = arith.constant 0 : index
    %26 = vector.load %arg5[%c0_10, %c0_11] : memref<4x16xf32, #tpu.memory_space<vmem>>, vector<4x16xf32>
    %27 = arith.addf %26, %25 : vector<4x16xf32>
    %c0_12 = arith.constant 0 : index
    %c0_13 = arith.constant 0 : index
    %28 = vector.load %arg5[%c0_12, %c0_13] : memref<4x16xf32, #tpu.memory_space<vmem>>, vector<4x16xf32>
    tpu.vector_store %arg5[%c0_12, %c0_13], %27 {strides = array<i32>} : memref<4x16xf32, #tpu.memory_space<vmem>>, vector<4x16xf32>,
    %c0_i32_14 = arith.constant 0 : i32
    %29 = arith.cmpi eq, %arg1, %c0_i32_14 : i32
    %30 = arith.extui %29 : i1 to i32
    %c0_i32_15 = arith.constant 0 : i32
    %31 = arith.cmpi ne, %30, %c0_i32_15 : i32
    scf.if %31 {
      %c0_16 = arith.constant 0 : index
      %c0_17 = arith.constant 0 : index
      %32 = vector.load %arg5[%c0_16, %c0_17] : memref<4x16xf32, #tpu.memory_space<vmem>>, vector<4x16xf32>
      %cst_18 = arith.constant dense<0.000000e+00> : vector<16xf32>
      %33 = vector.multi_reduction <add>, %32, %cst_18 [0] : vector<4x16xf32> to vector<16xf32>
      %34 = vector.shape_cast %33 : vector<16xf32> to vector<1x16xf32>
      %c0_19 = arith.constant 0 : index
      %c0_20 = arith.constant 0 : index
      %c0_21 = arith.constant 0 : index
      %35 = vector.load %arg4[%c0_19, %c0_20, %c0_21] : memref<1x1x16xf32, #tpu.memory_space<vmem>>, vector<1x1x16xf32>
      %36 = vector.shape_cast %35 : vector<1x1x16xf32> to vector<1x16xf32>
      %37 = vector.shape_cast %34 : vector<1x16xf32> to vector<1x1x16xf32>
      tpu.vector_store %arg4[%c0_19, %c0_20, %c0_21], %37 {strides = array<i32>} : memref<1x1x16xf32, #tpu.memory_space<vmem>>, vector<1x1x16xf32>,
    } else {
    }
    return
  }
  func.func @transform_0(%arg0: i32, %arg1: i32) -> (i32, i32, i32) {
    %c0_i32 = arith.constant 0 : i32
    %c0_i32_0 = arith.constant 0 : i32
    return %c0_i32, %arg0, %arg1 : i32, i32, i32
  }
  func.func @transform_1(%arg0: i32, %arg1: i32) -> (i32, i32) {
    %c0_i32 = arith.constant 0 : i32
    return %arg0, %arg1 : i32, i32
  }
  func.func @transform_2(%arg0: i32, %arg1: i32) -> (i32, i32, i32) {
    %c0_i32 = arith.constant 0 : i32
    %c0_i32_0 = arith.constant 0 : i32
    %c0_i32_1 = arith.constant 0 : i32
    return %arg0, %c0_i32, %c0_i32_0 : i32, i32, i32
  }
}

</mosaic_0001>

<llo_original>
// kernel: tpu_custom_call.1
$region0: #{tpu_custom_call.1}
  #allocation0 [shape = 'u32[]', space=smem, size = 0x4, offset = 0x4, fixed_abs, tag = 'smem constant byte address 0x4 - core index']
  #allocation1 [shape = 'u32[144,128]{1,0:T(1,128)}', space=vmem, size = 0x12000, scoped, tag = 'internal scratch']
  #allocation2 [shape = 'f32[4,16]{1,0:T(4,128)}', space=vmem, size = 0x800, scoped, tag = 'scratch operand']
  %s0 = inlined_call_operand.hbm [shape: f32[2,4,16], index: 0, kind: input, shape index: {}]
  %s1 = inlined_call_operand.hbm [shape: f32[4,16], index: 1, kind: input, shape index: {}]
  %s2 = inlined_call_operand.hbm [shape: f32[1,1,16], index: 2, kind: output, shape index: {}]
  %s3 = sld [smem:[#allocation0]]
  $region34: #{tpu_custom_call.1} parent=0
    _
  %s5 = ssub.s32 1, %s3
  %s6 = scalar_select 0, %s5, %s3
  $region1: #{tpu_custom_call.1} parent=0
    #allocation3 [shape = 'u8[4096]{0}', space=vmem, size = 0x1000, scoped, tag = 'input window, operand 0, single buffered']
    #allocation4 [shape = 's32[1]{0}', space=sflag, size = 0x4, scoped, tag = 'scoped memory for tpu_custom_call.1']
    #allocation5 [shape = 's32[1]{0}', space=sflag, size = 0x4, scoped, tag = 'scoped memory for tpu_custom_call.1']
    #allocation6 [shape = 'u8[2048]{0}', space=vmem, size = 0x800, scoped, tag = 'input window, operand 1, single buffered']
    #allocation7 [shape = 's32[1]{0}', space=sflag, size = 0x4, scoped, tag = 'scoped memory for tpu_custom_call.1']
    #allocation8 [shape = 'u8[512]{0}', space=vmem, size = 0x400, scoped, tag = 'output window, operand 0, single buffered']
    %7 = vsyncpa [#allocation4], 0
    %8 = vsyncpa [#allocation7], 0
    %9 = vsyncpa [#allocation5], 0
    // Predicated region
    $region2: #{tpu_custom_call.1} parent=1 // pred_check
      _
    $region3: #{tpu_custom_call.1} parent=1 // pred_check_branch
      %11 = sbr.rel (0) target = $region5
    $region4: #{tpu_custom_call.1} parent=1 // pred_region
      %s13 = ssub.s32 128, 128
      %14 = vsyncadd [#allocation4], %s13
      %s15 = sshll.u32 [#allocation3], 4
      %s16 = int_to_ptr.vmem [resolvable:$true] %s15
      %21 = dma.hbm_to_vmem [thread:$0]  %s0, 128, %s16, [#allocation4], 64, 64, 4
    $region5: #{tpu_custom_call.1} parent=1 // pred_fallthru
      _
    // Predicated region
    $region6: #{tpu_custom_call.1} parent=1 // pred_check
      _
    $region7: #{tpu_custom_call.1} parent=1 // pred_check_branch
      %23 = sbr.rel (0) target = $region9
    $region8: #{tpu_custom_call.1} parent=1 // pred_region
      %s25 = ssub.s32 64, 64
      %26 = vsyncadd [#allocation7], %s25
      %s28 = sshll.u32 [#allocation6], 4
      %s29 = int_to_ptr.vmem [resolvable:$true] %s28
      %31 = dma.hbm_to_vmem [thread:$0]  %s1, 64, %s29, [#allocation7]
    $region9: #{tpu_custom_call.1} parent=1 // pred_fallthru
      _
    // Predicated region
    $region10: #{tpu_custom_call.1} parent=1 // pred_check
      _
    $region11: #{tpu_custom_call.1} parent=1 // pred_check_branch
      %33 = sbr.rel (0) target = $region13
    $region12: #{tpu_custom_call.1} parent=1 // pred_region
      %34 = dma.done [#allocation4], 128
    $region13: #{tpu_custom_call.1} parent=1 // pred_fallthru
      _
    // Predicated region
    $region14: #{tpu_custom_call.1} parent=1 // pred_check
      _
    $region15: #{tpu_custom_call.1} parent=1 // pred_check_branch
      %36 = sbr.rel (0) target = $region17
    $region16: #{tpu_custom_call.1} parent=1 // pred_region
      %37 = dma.done [#allocation7], 64
    $region17: #{tpu_custom_call.1} parent=1 // pred_fallthru
      _
    %p38 = scmp.eq.s32.totalorder 0, 0
    // Predicated region
    $region18: #{tpu_custom_call.1} parent=1 // pred_check
      %p39 = pneg %p38
    $region19: #{tpu_custom_call.1} parent=1 // pred_check_branch
      %41 = sbr.rel (%p39) target = $region21
    $region20: #{tpu_custom_call.1} parent=1 // pred_region
      %vm42 = vcmask 125952
      %43 = vst.msk [vmem:[#allocation2] sm:$0xf] %vm42, 0.0
    $region21: #{tpu_custom_call.1} parent=1 // pred_fallthru
      _
    %v44 = vld [vmem:[#allocation3] sm:$0xf]
    %s45 = scalar_lea.vmem [#allocation3], 4
    %v46 = vld [vmem:[%s45] sm:$0xf]
    %v47 = vld [vmem:[#allocation6] sm:$0xf]
    %v48 = vsub.f32 %v47, %v44
    %v49 = vand.u32 2147483647, %v48
    %v50 = vrcp.pop %v46
    %v51 = vmul.f32 %v49, %v50
    %v52 = vmul.f32 %v51, 0.70710677
    %v53 = verf.f32.pop %v52
    %v54 = vmul.f32 %v51, %v53
    %v55 = vmul.f32 %v51, -0.5
    %v56 = vmul.f32 %v55, %v51
    %v57 = vmul.f32 %v56, 1.442695
    %v58 = vpow.pop %v57
    %v59 = vmul.f32 %v58, 0.7978846
    %v60 = vsub.f32 %v59, 0.5641896
    %v61 = vadd.f32 %v54, %v60
    %v62 = vmul.f32 %v46, %v61
    %v63 = vld [vmem:[#allocation2] sm:$0xf]
    %v64 = vadd.f32 %v63, %v62
    %vm65 = vcmask 125952
    %66 = vst.msk [vmem:[#allocation2] sm:$0xf] %vm65, %v64
    // Predicated region
    $region22: #{tpu_custom_call.1} parent=1 // pred_check
      %p67 = pneg %p38
    $region23: #{tpu_custom_call.1} parent=1 // pred_check_branch
      %69 = sbr.rel (%p67) target = $region25
    $region24: #{tpu_custom_call.1} parent=1 // pred_region
      %v70 = vld [vmem:[#allocation2] sm:$0xf]
      %v71 = vsel %vm65, %v70, 0.0
      %v72 = vrot.slane %v71, 4
      %v73 = vadd.f32 %v71, %v72
      %v74 = vrot.slane %v73, 2
      %v75 = vadd.f32 %v73, %v74
      %v76 = vrot.slane %v75, 1
      %v77 = vadd.f32 %v75, %v76
      %vm78 = vcmask 122880
      %79 = vst.msk [vmem:[#allocation8] sm:$0x1] %vm78, %v77
    $region25: #{tpu_custom_call.1} parent=1 // pred_fallthru
      _
    // Predicated region
    $region26: #{tpu_custom_call.1} parent=1 // pred_check
      _
    $region27: #{tpu_custom_call.1} parent=1 // pred_check_branch
      %81 = sbr.rel (0) target = $region29
    $region28: #{tpu_custom_call.1} parent=1 // pred_region
      %s83 = ssub.s32 16, 16
      %84 = vsyncadd [#allocation5], %s83
      %s86 = sshll.u32 [#allocation8], 4
      %s87 = int_to_ptr.vmem [resolvable:$true] %s86
      %89 = dma.vmem_to_hbm [thread:$0]  %s87, 16, %s2, [#allocation5]
    $region29: #{tpu_custom_call.1} parent=1 // pred_fallthru
      _
    // Predicated region
    $region30: #{tpu_custom_call.1} parent=1 // pred_check
      _
    $region31: #{tpu_custom_call.1} parent=1 // pred_check_branch
      %91 = sbr.rel (0) target = $region33
    $region32: #{tpu_custom_call.1} parent=1 // pred_region
      %92 = dma.done [#allocation5], 16
    $region33: #{tpu_custom_call.1} parent=1 // pred_fallthru
      _
    %93 = vsyncpa [#allocation4], 1
    %94 = vsyncpa [#allocation7], 1
    %95 = vsyncpa [#allocation5], 1

</llo_original>
